<compile_context>
chip_gen: v5e
topology: v5e:2x2
jax: 0.10.0
libtpu: 0.0.40
codegen_flags: <defaults>
</compile_context>

<pallas_src>
import functools
import math
import re

import jax
import jax.numpy as jnp
from jax import lax
from jax.experimental import pallas as pl
from jax.experimental.pallas import tpu as pltpu


def _round_up(n, m):
    return (n + m - 1) // m * m


def _tpu_generation():
    """Best-effort TPU generation (4/5/6/7...) from the device kind string."""
    try:
        kind = jax.devices()[0].device_kind.lower()
    except Exception:
        return 6
    m = re.search(r"v(\d+)", kind) or re.search(r"(\d+)", kind)
    return int(m.group(1)) if m else 6


def _vmem_bytes_estimate(bb, t, ts, d, f, vp, weight_bufs=2):
    """Rough per-grid-step VMEM footprint (conservative: weights counted
    double-buffered even though we request Buffered(1))."""
    per_bb = (
        2 * t * d * 4        # x input block, double-buffered, f32
        + 2 * t * d * 4      # output block, double-buffered, f32
        + t * f * 2          # fused qkv scratch, bf16
        + t * vp * 4         # read accumulator scratch, f32
        + 6 * t * ts * 4     # softmax temporaries (logits, exp, probs, ...)
    )
    fixed = weight_bufs * (d * f * 2 + f * 4) + 2 * t * ts * 4  # weights + mask iotas
    return fixed + bb * per_bb


def _choose_s_tile(T, budget, d, f, vp):
    """Key-axis (source) tile size: bounds the (BB, T, ts) softmax temporaries
    so large-T configs fit v7x's 64 MiB VMEM.  ts must divide T."""
    if T <= 512:
        return T
    cands = [c for c in (512, 256, 128, 64, 32, 16, 8) if T % c == 0]
    if not cands:
        return T  # TODO(synk): pad odd sequence lengths to a multiple of 8
    for ts in cands:
        if _vmem_bytes_estimate(1, T, ts, d, f, vp) <= budget:
            return ts
    return cands[-1]


def _choose_block_batch(B, T, ts, d, f, vp, budget, gen):
    """Largest divisor of B whose block fits the VMEM budget.  On v7x (2 TCs)
    keep >= 2 grid steps so both cores get work; on v5e/v6e (single TC) extra
    steps are pure ~0.35us/step serial overhead, so prefer the largest BB."""
    max_bb = B
    if gen >= 7 and B >= 2:
        max_bb = max(1, B // 2)
    best = 1
    for bb in range(1, max_bb + 1):
        if B % bb == 0 and _vmem_bytes_estimate(bb, T, ts, d, f, vp) <= budget:
            best = bb
    return best


def _attention_kernel(x_ref, w_ref, b_ref, o_ref, qkv_s, acc_s, *,
                      bb, t, d, kp, vp, ts, sqrt_k, exp_dtype):
    # --- fused QKV projection: one wide MXU matmul over all BB*T rows -------
    # x_ref is read here only to form the bf16 operand; the f32 block is NOT
    # kept live across the body (re-read at the residual add below).
    x2 = x_ref[...].reshape(bb * t, d).astype(jnp.bfloat16)
    qkv = jnp.dot(x2, w_ref[...], preferred_element_type=jnp.float32)
    qkv = qkv + b_ref[...]
    qkv_s[...] = qkv.reshape(bb, t, 2 * kp + vp).astype(jnp.bfloat16)

    acc_s[...] = jnp.zeros_like(acc_s)

    # Hoisted batch-1 mask iotas; broadcast over BB only at the logits add.
    q_idx = lax.broadcasted_iota(jnp.int32, (1, t, ts), 1)
    s_idx = lax.broadcasted_iota(jnp.int32, (1, t, ts), 2)

    n_s = t // ts

    def s_step(si, carry):
        s0 = pl.multiple_of(si * ts, ts)
        q = qkv_s[:, :, kp:2 * kp]                   # (bb, t,  kp) bf16
        k_tile = qkv_s[:, pl.ds(s0, ts), :kp]        # (bb, ts, kp) bf16
        v_tile = qkv_s[:, pl.ds(s0, ts), 2 * kp:]    # (bb, ts, vp) bf16

        # logits[b, t, s] = q[b, t] . k[b, s]  (transpose-free MXU einsum)
        logits = jnp.einsum("btk,bsk->bts", q, k_tile,
                            preferred_element_type=jnp.float32)

        # Strictly-upper-triangular mask (key index > query index) as a
        # single additive (1, t, ts) term -> one VPU add per logit element.
        mask = jnp.where(s_idx + s0 > q_idx, -jnp.inf, 0.0)
        logits = logits + mask

        # Softmax over the QUERY axis (torch dim=1).  It is column-wise in the
        # key axis, hence fully local to this key tile (no online rescale).
        # The diagonal is never masked, so every column has a finite max.
        # Post-softmax 1/sqrt(k) is folded into the EUP reciprocal.
        m = jnp.max(logits, axis=1, keepdims=True)
        e = jnp.exp((logits - m).astype(exp_dtype))        # bf16 on v6e/v7x
        denom = jnp.sum(e.astype(jnp.float32), axis=1, keepdims=True)
        scale = pl.reciprocal(denom * sqrt_k, approx=True)
        probs = (e * scale.astype(exp_dtype)).astype(jnp.bfloat16)

        # read += probs @ V for this key tile (f32 accumulation in VMEM).
        acc_s[...] += jnp.einsum("bts,bsv->btv", probs, v_tile,
                                 preferred_element_type=jnp.float32)
        return carry

    lax.fori_loop(0, n_s, s_step, 0, unroll=n_s <= 4)

    # Residual add: re-read x_ref (cheap VMEM load) instead of keeping the f32
    # block live.  Output is written at the true feature width D: no padded
    # output / wrapper slice HBM round trip (masked stores when D % 128 != 0
    # are cheaper than 8x write bytes + an extra slice kernel at small D).
    o_ref[...] = (x_ref[...] + acc_s[:, :, :d]).astype(o_ref.dtype)


def prepare_attention_params(wk, bk, wq, bq, wv, bv):
    """One-time weight prep (hoist out of the per-call path): pad projection
    output dims to lane width (128) and fuse K/Q/V into a single bf16 weight
    and a single f32 bias."""
    K = wk.shape[1]
    V = wv.shape[1]
    Kp = _round_up(K, 128)
    Vp = _round_up(V, 128)

    def pad_w(w, fo):
        return jnp.pad(w, ((0, 0), (0, fo - w.shape[1])))

    def pad_b(b, fo):
        return jnp.pad(b, ((0, fo - b.shape[0]),))

    w_qkv = jnp.concatenate([pad_w(wk, Kp), pad_w(wq, Kp), pad_w(wv, Vp)],
                            axis=1).astype(jnp.bfloat16)
    b_qkv = jnp.concatenate([pad_b(bk, Kp), pad_b(bq, Kp), pad_b(bv, Vp)]
                            ).reshape(1, 2 * Kp + Vp).astype(jnp.float32)
    return w_qkv, b_qkv, K, V, Kp, Vp


def attention_block(x, params, k_size):
    """x: (B, T, D) f32.  params: output of prepare_attention_params.
    Weights stored (in_features, out_features): the kernel does x @ W + b
    (equivalent to torch.nn.Linear's x @ W.T + b)."""
    w_qkv, b_qkv, K, V, Kp, Vp = params
    B, T, D = x.shape
    assert V == D, "residual add in the reference module requires v_size == dims"
    F = 2 * Kp + Vp

    gen = _tpu_generation()
    vmem_cap = (64 if gen >= 7 else 128) * 1024 * 1024
    budget = int(vmem_cap * 0.6)

    ts = _choose_s_tile(T, budget, D, F, Vp)
    BB = _choose_block_batch(B, T, ts, D, F, Vp, budget, gen)
    grid = (B // BB,)

    # bf16 exp / elementwise softmax on v6e/v7x (bf16 EUP/VPU); f32 on v5e.
    exp_dtype = jnp.float32 if gen <= 5 else jnp.bfloat16

    # TODO(synk): if production T is small (< MXU width), fold several batch
    #             elements into the M dim of the attention matmuls with a
    #             block-diagonal mask to raise T x T MXU utilization.

    kernel = functools.partial(
        _attention_kernel, bb=BB, t=T, d=D, kp=Kp, vp=Vp, ts=ts,
        sqrt_k=math.sqrt(k_size), exp_dtype=exp_dtype)

    def build_call(weight_pipeline_mode):
        spec_kwargs = ({} if weight_pipeline_mode is None
                       else dict(pipeline_mode=weight_pipeline_mode))
        return pl.pallas_call(
            kernel,
            out_shape=jax.ShapeDtypeStruct((B, T, D), x.dtype),
            grid_spec=pltpu.PrefetchScalarGridSpec(
                num_scalar_prefetch=0,
                grid=grid,
                in_specs=[
                    pl.BlockSpec((BB, T, D), lambda i: (i, 0, 0)),     # x block
                    pl.BlockSpec((D, F), lambda i: (0, 0), **spec_kwargs),  # W_qkv
                    pl.BlockSpec((1, F), lambda i: (0, 0), **spec_kwargs),  # bias
                ],
                out_specs=pl.BlockSpec((BB, T, D), lambda i: (i, 0, 0)),
                scratch_shapes=[
                    pltpu.VMEM((BB, T, F), jnp.bfloat16),   # fused q/k/v
                    pltpu.VMEM((BB, T, Vp), jnp.float32),   # read accumulator
                ],
            ),
            compiler_params=pltpu.CompilerParams(
                dimension_semantics=("parallel",),
                vmem_limit_bytes=int(vmem_cap * 0.8)),
        )

    try:
        # Constant-index weight/bias blocks gain nothing from double buffering;
        # single-buffer them to halve their VMEM footprint.
        out = build_call(pl.Buffered(1))(x, w_qkv, b_qkv)
    except Exception:
        # Fallback if pipeline_mode / Buffered(1) is unsupported by this jax.
        out = build_call(None)(x, w_qkv, b_qkv)
    return out


def _reference(x, wk, bk, wq, bq, wv, bv, k_size):
    """Pure-JAX f32 reference mirroring the PyTorch forward exactly."""
    keys = x @ wk + bk
    queries = x @ wq + bq
    values = x @ wv + bv
    logits = jnp.einsum("btk,bsk->bts", queries, keys)
    T = logits.shape[1]
    mask = jnp.triu(jnp.ones((T, T), dtype=bool), k=1)
    logits = jnp.where(mask[None], -jnp.inf, logits)
    probs = jax.nn.softmax(logits, axis=1) / math.sqrt(k_size)
    read = jnp.einsum("bts,bsv->btv", probs, values)
    return x + read


if __name__ == "__main__":
    # Small shapes consistent with the module: B x T x D input.
    B, T, D = 2, 8, 16
    K_SIZE, V_SIZE = 8, 16   # v_size == dims so the residual add is well-defined

    key = jax.random.PRNGKey(0)
    kx, kwk, kbk, kwq, kbq, kwv, kbv = jax.random.split(key, 7)

    x = jax.random.normal(kx, (B, T, D), dtype=jnp.float32)

    # Deterministic parameter init (synthetic; matches nn.Linear shapes,
    # stored transposed as (in, out)).
    def init_w(k, fan_in, fan_out):
        bound = 1.0 / math.sqrt(fan_in)
        return jax.random.uniform(k, (fan_in, fan_out), jnp.float32, -bound, bound)

    def init_b(k, fan_in, fan_out):
        bound = 1.0 / math.sqrt(fan_in)
        return jax.random.uniform(k, (fan_out,), jnp.float32, -bound, bound)

    wk = init_w(kwk, D, K_SIZE); bk = init_b(kbk, D, K_SIZE)
    wq = init_w(kwq, D, K_SIZE); bq = init_b(kbq, D, K_SIZE)
    wv = init_w(kwv, D, V_SIZE); bv = init_b(kbv, D, V_SIZE)

    # One-time weight prep (pad + fuse + bf16 cast), hoisted out of the call.
    params = prepare_attention_params(wk, bk, wq, bq, wv, bv)

    out = attention_block(x, params, K_SIZE)
    out = jax.block_until_ready(out)

    ref = _reference(x, wk, bk, wq, bq, wv, bv, K_SIZE)
    assert out.shape == (B, T, D)
    # bf16 MXU operands + approximate EUP reciprocal => bf16-class tolerance
    # against the pure-f32 reference.
    assert jnp.allclose(out, ref, atol=1e-1, rtol=1e-1), "mismatch vs reference"

    print("KERNEL_OK")
</pallas_src>

<mosaic_0001>
module attributes {stable_mosaic.version = 11 : i64} {
  func.func @_attention_kernel(%arg0: i32, %arg1: memref<2x8x16xf32, #tpu.memory_space<vmem>>, %arg2: memref<16x384xbf16, #tpu.memory_space<vmem>>, %arg3: memref<1x384xf32, #tpu.memory_space<vmem>>, %arg4: memref<2x8x16xf32, #tpu.memory_space<vmem>>, %arg5: memref<2x8x384xbf16, #tpu.memory_space<vmem>>, %arg6: memref<2x8x128xf32, #tpu.memory_space<vmem>>) attributes {dimension_semantics = [#tpu.dimension_semantics<parallel>], iteration_bounds = array<i64: 1>, scalar_prefetch = 0 : i64, scratch_operands = 2 : i64, tpu.core_type = #tpu.core_type<tc>, window_params = [{transform_indices = @transform_0, window_bounds = array<i64: 2, 8, 16>}, {pipeline_mode = #tpu.pipeline_mode<synchronous>, transform_indices = @transform_1, window_bounds = array<i64: 16, 384>}, {pipeline_mode = #tpu.pipeline_mode<synchronous>, transform_indices = @transform_2, window_bounds = array<i64: 1, 384>}, {transform_indices = @transform_3, window_bounds = array<i64: 2, 8, 16>}]} {
    %c0 = arith.constant 0 : index
    %c0_0 = arith.constant 0 : index
    %c0_1 = arith.constant 0 : index
    %0 = vector.load %arg1[%c0, %c0_0, %c0_1] : memref<2x8x16xf32, #tpu.memory_space<vmem>>, vector<2x8x16xf32>
    %1 = vector.shape_cast %0 : vector<2x8x16xf32> to vector<16x16xf32>
    %2 = arith.truncf %1 : vector<16x16xf32> to vector<16x16xbf16>
    %c0_2 = arith.constant 0 : index
    %c0_3 = arith.constant 0 : index
    %3 = vector.load %arg2[%c0_2, %c0_3] : memref<16x384xbf16, #tpu.memory_space<vmem>>, vector<16x384xbf16>
    %cst = arith.constant dense<0.000000e+00> : vector<16x384xf32>
    %4 = tpu.matmul %2, %3, %cst {dimension_numbers = #tpu.dot_dimension_numbers<[1], [0], [0], [1], [0, 0, 1, 1], [], []>} : vector<16x16xbf16>, vector<16x384xbf16>, vector<16x384xf32> -> vector<16x384xf32>
    %c0_4 = arith.constant 0 : index
    %c0_5 = arith.constant 0 : index
    %5 = vector.load %arg3[%c0_4, %c0_5] : memref<1x384xf32, #tpu.memory_space<vmem>>, vector<1x384xf32>
    %6 = vector.broadcast %5 : vector<1x384xf32> to vector<16x384xf32>
    %7 = arith.addf %4, %6 : vector<16x384xf32>
    %8 = vector.shape_cast %7 : vector<16x384xf32> to vector<2x8x384xf32>
    %9 = arith.truncf %8 : vector<2x8x384xf32> to vector<2x8x384xbf16>
    %c0_6 = arith.constant 0 : index
    %c0_7 = arith.constant 0 : index
    %c0_8 = arith.constant 0 : index
    %10 = vector.load %arg5[%c0_6, %c0_7, %c0_8] : memref<2x8x384xbf16, #tpu.memory_space<vmem>>, vector<2x8x384xbf16>
    tpu.vector_store %arg5[%c0_6, %c0_7, %c0_8], %9 {strides = array<i32>} : memref<2x8x384xbf16, #tpu.memory_space<vmem>>, vector<2x8x384xbf16>,
    %cst_9 = arith.constant 0.000000e+00 : f32
    %11 = vector.broadcast %cst_9 : f32 to vector<2x8x128xf32>
    %c0_10 = arith.constant 0 : index
    %c0_11 = arith.constant 0 : index
    %c0_12 = arith.constant 0 : index
    %12 = vector.load %arg6[%c0_10, %c0_11, %c0_12] : memref<2x8x128xf32, #tpu.memory_space<vmem>>, vector<2x8x128xf32>
    tpu.vector_store %arg6[%c0_10, %c0_11, %c0_12], %11 {strides = array<i32>} : memref<2x8x128xf32, #tpu.memory_space<vmem>>, vector<2x8x128xf32>,
    %13 = tpu.iota {dimensions = array<i32: 1>} : vector<1x8x8xi32>
    %14 = tpu.iota {dimensions = array<i32: 2>} : vector<1x8x8xi32>
    %c0_i32 = arith.constant 0 : i32
    %c8_i32 = arith.constant 8 : i32
    %15 = arith.muli %c0_i32, %c8_i32 : i32
    %16 = tpu.assume_multiple %15, 8 : i32
    %c0_13 = arith.constant 0 : index
    %c0_14 = arith.constant 0 : index
    %c128 = arith.constant 128 : index
    %17 = vector.load %arg5[%c0_13, %c0_14, %c128] : memref<2x8x384xbf16, #tpu.memory_space<vmem>>, vector<2x8x128xbf16>
    %c0_15 = arith.constant 0 : index
    %18 = arith.index_cast %16 : i32 to index
    %c0_16 = arith.constant 0 : index
    %19 = vector.load %arg5[%c0_15, %18, %c0_16] : memref<2x8x384xbf16, #tpu.memory_space<vmem>>, vector<2x8x128xbf16>
    %c0_17 = arith.constant 0 : index
    %20 = arith.index_cast %16 : i32 to index
    %c256 = arith.constant 256 : index
    %21 = vector.load %arg5[%c0_17, %20, %c256] : memref<2x8x384xbf16, #tpu.memory_space<vmem>>, vector<2x8x128xbf16>
    "tpu.trace_start"() <{level = 10 : i32, message = "btk,bsk->bts"}> : () -> ()
    %cst_18 = arith.constant dense<0.000000e+00> : vector<2x8x8xf32>
    %22 = tpu.matmul %17, %19, %cst_18 {dimension_numbers = #tpu.dot_dimension_numbers<[2], [2], [1], [1], [0, 0, 0, 1, 1, 1], [0], [0]>} : vector<2x8x128xbf16>, vector<2x8x128xbf16>, vector<2x8x8xf32> -> vector<2x8x8xf32>
    "tpu.trace_stop"() : () -> ()
    %23 = vector.broadcast %16 : i32 to vector<1x8x8xi32>
    %24 = arith.addi %14, %23 : vector<1x8x8xi32>
    %25 = arith.cmpi sgt, %24, %13 : vector<1x8x8xi32>
    %cst_19 = arith.constant 0xFF800000 : f32
    %cst_20 = arith.constant 0.000000e+00 : f32
    %26 = vector.broadcast %cst_19 : f32 to vector<1x8x8xf32>
    %27 = vector.broadcast %cst_20 : f32 to vector<1x8x8xf32>
    %28 = arith.select %25, %26, %27 : vector<1x8x8xi1>, vector<1x8x8xf32>
    %29 = vector.broadcast %28 : vector<1x8x8xf32> to vector<2x8x8xf32>
    %30 = arith.addf %22, %29 : vector<2x8x8xf32>
    %cst_21 = arith.constant dense<0xFF800000> : vector<2x8xf32>
    %31 = vector.multi_reduction <maximumf>, %30, %cst_21 [1] : vector<2x8x8xf32> to vector<2x8xf32>
    %32 = vector.shape_cast %31 : vector<2x8xf32> to vector<2x1x8xf32>
    %33 = vector.broadcast %32 : vector<2x1x8xf32> to vector<2x8x8xf32>
    %34 = arith.subf %30, %33 : vector<2x8x8xf32>
    %35 = arith.truncf %34 : vector<2x8x8xf32> to vector<2x8x8xbf16>
    %36 = math.exp %35 : vector<2x8x8xbf16>
    %37 = arith.extf %36 : vector<2x8x8xbf16> to vector<2x8x8xf32>
    %cst_22 = arith.constant dense<0.000000e+00> : vector<2x8xf32>
    %38 = vector.multi_reduction <add>, %37, %cst_22 [1] : vector<2x8x8xf32> to vector<2x8xf32>
    %39 = vector.shape_cast %38 : vector<2x8xf32> to vector<2x1x8xf32>
    %cst_23 = arith.constant 2.82842708 : f32
    %40 = vector.broadcast %cst_23 : f32 to vector<2x1x8xf32>
    %41 = arith.mulf %39, %40 : vector<2x1x8xf32>
    %42 = tpu.reciprocal %41 {approx = true} : vector<2x1x8xf32> -> vector<2x1x8xf32>
    %43 = arith.truncf %42 : vector<2x1x8xf32> to vector<2x1x8xbf16>
    %44 = vector.broadcast %43 : vector<2x1x8xbf16> to vector<2x8x8xbf16>
    %45 = arith.mulf %36, %44 : vector<2x8x8xbf16>
    %c0_24 = arith.constant 0 : index
    %c0_25 = arith.constant 0 : index
    %c0_26 = arith.constant 0 : index
    %46 = vector.load %arg6[%c0_24, %c0_25, %c0_26] : memref<2x8x128xf32, #tpu.memory_space<vmem>>, vector<2x8x128xf32>
    "tpu.trace_start"() <{level = 10 : i32, message = "bts,bsv->btv"}> : () -> ()
    %cst_27 = arith.constant dense<0.000000e+00> : vector<2x8x128xf32>
    %47 = tpu.matmul %45, %21, %cst_27 {dimension_numbers = #tpu.dot_dimension_numbers<[2], [1], [1], [2], [0, 0, 0, 1, 1, 2], [0], [0]>} : vector<2x8x8xbf16>, vector<2x8x128xbf16>, vector<2x8x128xf32> -> vector<2x8x128xf32>
    "tpu.trace_stop"() : () -> ()
    %48 = arith.addf %46, %47 : vector<2x8x128xf32>
    %c0_28 = arith.constant 0 : index
    %c0_29 = arith.constant 0 : index
    %c0_30 = arith.constant 0 : index
    %49 = vector.load %arg6[%c0_28, %c0_29, %c0_30] : memref<2x8x128xf32, #tpu.memory_space<vmem>>, vector<2x8x128xf32>
    tpu.vector_store %arg6[%c0_28, %c0_29, %c0_30], %48 {strides = array<i32>} : memref<2x8x128xf32, #tpu.memory_space<vmem>>, vector<2x8x128xf32>,
    %c1_i32 = arith.constant 1 : i32
    %c0_31 = arith.constant 0 : index
    %c0_32 = arith.constant 0 : index
    %c0_33 = arith.constant 0 : index
    %50 = vector.load %arg1[%c0_31, %c0_32, %c0_33] : memref<2x8x16xf32, #tpu.memory_space<vmem>>, vector<2x8x16xf32>
    %c0_34 = arith.constant 0 : index
    %c0_35 = arith.constant 0 : index
    %c0_36 = arith.constant 0 : index
    %51 = vector.load %arg6[%c0_34, %c0_35, %c0_36] : memref<2x8x128xf32, #tpu.memory_space<vmem>>, vector<2x8x16xf32>
    %52 = arith.addf %50, %51 : vector<2x8x16xf32>
    %c0_37 = arith.constant 0 : index
    %c0_38 = arith.constant 0 : index
    %c0_39 = arith.constant 0 : index
    %53 = vector.load %arg4[%c0_37, %c0_38, %c0_39] : memref<2x8x16xf32, #tpu.memory_space<vmem>>, vector<2x8x16xf32>
    tpu.vector_store %arg4[%c0_37, %c0_38, %c0_39], %52 {strides = array<i32>} : memref<2x8x16xf32, #tpu.memory_space<vmem>>, vector<2x8x16xf32>,
    return
  }
  func.func @transform_0(%arg0: i32) -> (i32, i32, i32) {
    %c0_i32 = arith.constant 0 : i32
    %c0_i32_0 = arith.constant 0 : i32
    %c0_i32_1 = arith.constant 0 : i32
    return %arg0, %c0_i32, %c0_i32_0 : i32, i32, i32
  }
  func.func @transform_1(%arg0: i32) -> (i32, i32) {
    %c0_i32 = arith.constant 0 : i32
    %c0_i32_0 = arith.constant 0 : i32
    %c0_i32_1 = arith.constant 0 : i32
    return %c0_i32, %c0_i32_0 : i32, i32
  }
  func.func @transform_2(%arg0: i32) -> (i32, i32) {
    %c0_i32 = arith.constant 0 : i32
    %c0_i32_0 = arith.constant 0 : i32
    %c0_i32_1 = arith.constant 0 : i32
    return %c0_i32, %c0_i32_0 : i32, i32
  }
  func.func @transform_3(%arg0: i32) -> (i32, i32, i32) {
    %c0_i32 = arith.constant 0 : i32
    %c0_i32_0 = arith.constant 0 : i32
    %c0_i32_1 = arith.constant 0 : i32
    return %arg0, %c0_i32, %c0_i32_0 : i32, i32, i32
  }
}

module attributes {stable_mosaic.version = 11 : i64} {
  func.func @_attention_kernel(%arg0: i32, %arg1: memref<2x8x16xf32, #tpu.memory_space<vmem>>, %arg2: memref<16x384xbf16, #tpu.memory_space<vmem>>, %arg3: memref<1x384xf32, #tpu.memory_space<vmem>>, %arg4: memref<2x8x16xf32, #tpu.memory_space<vmem>>, %arg5: memref<2x8x384xbf16, #tpu.memory_space<vmem>>, %arg6: memref<2x8x128xf32, #tpu.memory_space<vmem>>) attributes {dimension_semantics = [#tpu.dimension_semantics<parallel>], iteration_bounds = array<i64: 1>, scalar_prefetch = 0 : i64, scratch_operands = 2 : i64, tpu.core_type = #tpu.core_type<tc>, window_params = [{transform_indices = @transform_0, window_bounds = array<i64: 2, 8, 16>}, {pipeline_mode = #tpu.pipeline_mode<synchronous>, transform_indices = @transform_1, window_bounds = array<i64: 16, 384>}, {pipeline_mode = #tpu.pipeline_mode<synchronous>, transform_indices = @transform_2, window_bounds = array<i64: 1, 384>}, {transform_indices = @transform_3, window_bounds = array<i64: 2, 8, 16>}]} {
    %c0 = arith.constant 0 : index
    %c0_0 = arith.constant 0 : index
    %c0_1 = arith.constant 0 : index
    %0 = vector.load %arg1[%c0, %c0_0, %c0_1] : memref<2x8x16xf32, #tpu.memory_space<vmem>>, vector<2x8x16xf32>
    %1 = vector.shape_cast %0 : vector<2x8x16xf32> to vector<16x16xf32>
    %2 = arith.truncf %1 : vector<16x16xf32> to vector<16x16xbf16>
    %c0_2 = arith.constant 0 : index
    %c0_3 = arith.constant 0 : index
    %3 = vector.load %arg2[%c0_2, %c0_3] : memref<16x384xbf16, #tpu.memory_space<vmem>>, vector<16x384xbf16>
    %cst = arith.constant dense<0.000000e+00> : vector<16x384xf32>
    %4 = tpu.matmul %2, %3, %cst {dimension_numbers = #tpu.dot_dimension_numbers<[1], [0], [0], [1], [0, 0, 1, 1], [], []>} : vector<16x16xbf16>, vector<16x384xbf16>, vector<16x384xf32> -> vector<16x384xf32>
    %c0_4 = arith.constant 0 : index
    %c0_5 = arith.constant 0 : index
    %5 = vector.load %arg3[%c0_4, %c0_5] : memref<1x384xf32, #tpu.memory_space<vmem>>, vector<1x384xf32>
    %6 = vector.broadcast %5 : vector<1x384xf32> to vector<16x384xf32>
    %7 = arith.addf %4, %6 : vector<16x384xf32>
    %8 = vector.shape_cast %7 : vector<16x384xf32> to vector<2x8x384xf32>
    %9 = arith.truncf %8 : vector<2x8x384xf32> to vector<2x8x384xbf16>
    %c0_6 = arith.constant 0 : index
    %c0_7 = arith.constant 0 : index
    %c0_8 = arith.constant 0 : index
    %10 = vector.load %arg5[%c0_6, %c0_7, %c0_8] : memref<2x8x384xbf16, #tpu.memory_space<vmem>>, vector<2x8x384xbf16>
    tpu.vector_store %arg5[%c0_6, %c0_7, %c0_8], %9 {strides = array<i32>} : memref<2x8x384xbf16, #tpu.memory_space<vmem>>, vector<2x8x384xbf16>,
    %cst_9 = arith.constant 0.000000e+00 : f32
    %11 = vector.broadcast %cst_9 : f32 to vector<2x8x128xf32>
    %c0_10 = arith.constant 0 : index
    %c0_11 = arith.constant 0 : index
    %c0_12 = arith.constant 0 : index
    %12 = vector.load %arg6[%c0_10, %c0_11, %c0_12] : memref<2x8x128xf32, #tpu.memory_space<vmem>>, vector<2x8x128xf32>
    tpu.vector_store %arg6[%c0_10, %c0_11, %c0_12], %11 {strides = array<i32>} : memref<2x8x128xf32, #tpu.memory_space<vmem>>, vector<2x8x128xf32>,
    %13 = tpu.iota {dimensions = array<i32: 1>} : vector<1x8x8xi32>
    %14 = tpu.iota {dimensions = array<i32: 2>} : vector<1x8x8xi32>
    %c0_i32 = arith.constant 0 : i32
    %c8_i32 = arith.constant 8 : i32
    %15 = arith.muli %c0_i32, %c8_i32 : i32
    %16 = tpu.assume_multiple %15, 8 : i32
    %c0_13 = arith.constant 0 : index
    %c0_14 = arith.constant 0 : index
    %c128 = arith.constant 128 : index
    %17 = vector.load %arg5[%c0_13, %c0_14, %c128] : memref<2x8x384xbf16, #tpu.memory_space<vmem>>, vector<2x8x128xbf16>
    %c0_15 = arith.constant 0 : index
    %18 = arith.index_cast %16 : i32 to index
    %c0_16 = arith.constant 0 : index
    %19 = vector.load %arg5[%c0_15, %18, %c0_16] : memref<2x8x384xbf16, #tpu.memory_space<vmem>>, vector<2x8x128xbf16>
    %c0_17 = arith.constant 0 : index
    %20 = arith.index_cast %16 : i32 to index
    %c256 = arith.constant 256 : index
    %21 = vector.load %arg5[%c0_17, %20, %c256] : memref<2x8x384xbf16, #tpu.memory_space<vmem>>, vector<2x8x128xbf16>
    "tpu.trace_start"() <{level = 10 : i32, message = "btk,bsk->bts"}> : () -> ()
    %cst_18 = arith.constant dense<0.000000e+00> : vector<2x8x8xf32>
    %22 = tpu.matmul %17, %19, %cst_18 {dimension_numbers = #tpu.dot_dimension_numbers<[2], [2], [1], [1], [0, 0, 0, 1, 1, 1], [0], [0]>} : vector<2x8x128xbf16>, vector<2x8x128xbf16>, vector<2x8x8xf32> -> vector<2x8x8xf32>
    "tpu.trace_stop"() : () -> ()
    %23 = vector.broadcast %16 : i32 to vector<1x8x8xi32>
    %24 = arith.addi %14, %23 : vector<1x8x8xi32>
    %25 = arith.cmpi sgt, %24, %13 : vector<1x8x8xi32>
    %cst_19 = arith.constant 0xFF800000 : f32
    %cst_20 = arith.constant 0.000000e+00 : f32
    %26 = vector.broadcast %cst_19 : f32 to vector<1x8x8xf32>
    %27 = vector.broadcast %cst_20 : f32 to vector<1x8x8xf32>
    %28 = arith.select %25, %26, %27 : vector<1x8x8xi1>, vector<1x8x8xf32>
    %29 = vector.broadcast %28 : vector<1x8x8xf32> to vector<2x8x8xf32>
    %30 = arith.addf %22, %29 : vector<2x8x8xf32>
    %cst_21 = arith.constant dense<0xFF800000> : vector<2x8xf32>
    %31 = vector.multi_reduction <maximumf>, %30, %cst_21 [1] : vector<2x8x8xf32> to vector<2x8xf32>
    %32 = vector.shape_cast %31 : vector<2x8xf32> to vector<2x1x8xf32>
    %33 = vector.broadcast %32 : vector<2x1x8xf32> to vector<2x8x8xf32>
    %34 = arith.subf %30, %33 : vector<2x8x8xf32>
    %35 = arith.truncf %34 : vector<2x8x8xf32> to vector<2x8x8xbf16>
    %36 = math.exp %35 : vector<2x8x8xbf16>
    %37 = arith.extf %36 : vector<2x8x8xbf16> to vector<2x8x8xf32>
    %cst_22 = arith.constant dense<0.000000e+00> : vector<2x8xf32>
    %38 = vector.multi_reduction <add>, %37, %cst_22 [1] : vector<2x8x8xf32> to vector<2x8xf32>
    %39 = vector.shape_cast %38 : vector<2x8xf32> to vector<2x1x8xf32>
    %cst_23 = arith.constant 2.82842708 : f32
    %40 = vector.broadcast %cst_23 : f32 to vector<2x1x8xf32>
    %41 = arith.mulf %39, %40 : vector<2x1x8xf32>
    %42 = tpu.reciprocal %41 {approx = true} : vector<2x1x8xf32> -> vector<2x1x8xf32>
    %43 = arith.truncf %42 : vector<2x1x8xf32> to vector<2x1x8xbf16>
    %44 = vector.broadcast %43 : vector<2x1x8xbf16> to vector<2x8x8xbf16>
    %45 = arith.mulf %36, %44 : vector<2x8x8xbf16>
    %c0_24 = arith.constant 0 : index
    %c0_25 = arith.constant 0 : index
    %c0_26 = arith.constant 0 : index
    %46 = vector.load %arg6[%c0_24, %c0_25, %c0_26] : memref<2x8x128xf32, #tpu.memory_space<vmem>>, vector<2x8x128xf32>
    "tpu.trace_start"() <{level = 10 : i32, message = "bts,bsv->btv"}> : () -> ()
    %cst_27 = arith.constant dense<0.000000e+00> : vector<2x8x128xf32>
    %47 = tpu.matmul %45, %21, %cst_27 {dimension_numbers = #tpu.dot_dimension_numbers<[2], [1], [1], [2], [0, 0, 0, 1, 1, 2], [0], [0]>} : vector<2x8x8xbf16>, vector<2x8x128xbf16>, vector<2x8x128xf32> -> vector<2x8x128xf32>
    "tpu.trace_stop"() : () -> ()
    %48 = arith.addf %46, %47 : vector<2x8x128xf32>
    %c0_28 = arith.constant 0 : index
    %c0_29 = arith.constant 0 : index
    %c0_30 = arith.constant 0 : index
    %49 = vector.load %arg6[%c0_28, %c0_29, %c0_30] : memref<2x8x128xf32, #tpu.memory_space<vmem>>, vector<2x8x128xf32>
    tpu.vector_store %arg6[%c0_28, %c0_29, %c0_30], %48 {strides = array<i32>} : memref<2x8x128xf32, #tpu.memory_space<vmem>>, vector<2x8x128xf32>,
    %c1_i32 = arith.constant 1 : i32
    %c0_31 = arith.constant 0 : index
    %c0_32 = arith.constant 0 : index
    %c0_33 = arith.constant 0 : index
    %50 = vector.load %arg1[%c0_31, %c0_32, %c0_33] : memref<2x8x16xf32, #tpu.memory_space<vmem>>, vector<2x8x16xf32>
    %c0_34 = arith.constant 0 : index
    %c0_35 = arith.constant 0 : index
    %c0_36 = arith.constant 0 : index
    %51 = vector.load %arg6[%c0_34, %c0_35, %c0_36] : memref<2x8x128xf32, #tpu.memory_space<vmem>>, vector<2x8x16xf32>
    %52 = arith.addf %50, %51 : vector<2x8x16xf32>
    %c0_37 = arith.constant 0 : index
    %c0_38 = arith.constant 0 : index
    %c0_39 = arith.constant 0 : index
    %53 = vector.load %arg4[%c0_37, %c0_38, %c0_39] : memref<2x8x16xf32, #tpu.memory_space<vmem>>, vector<2x8x16xf32>
    tpu.vector_store %arg4[%c0_37, %c0_38, %c0_39], %52 {strides = array<i32>} : memref<2x8x16xf32, #tpu.memory_space<vmem>>, vector<2x8x16xf32>,
    return
  }
  func.func @transform_0(%arg0: i32) -> (i32, i32, i32) {
    %c0_i32 = arith.constant 0 : i32
    %c0_i32_0 = arith.constant 0 : i32
    %c0_i32_1 = arith.constant 0 : i32
    return %arg0, %c0_i32, %c0_i32_0 : i32, i32, i32
  }
  func.func @transform_1(%arg0: i32) -> (i32, i32) {
    %c0_i32 = arith.constant 0 : i32
    %c0_i32_0 = arith.constant 0 : i32
    %c0_i32_1 = arith.constant 0 : i32
    return %c0_i32, %c0_i32_0 : i32, i32
  }
  func.func @transform_2(%arg0: i32) -> (i32, i32) {
    %c0_i32 = arith.constant 0 : i32
    %c0_i32_0 = arith.constant 0 : i32
    %c0_i32_1 = arith.constant 0 : i32
    return %c0_i32, %c0_i32_0 : i32, i32
  }
  func.func @transform_3(%arg0: i32) -> (i32, i32, i32) {
    %c0_i32 = arith.constant 0 : i32
    %c0_i32_0 = arith.constant 0 : i32
    %c0_i32_1 = arith.constant 0 : i32
    return %arg0, %c0_i32, %c0_i32_0 : i32, i32, i32
  }
}

</mosaic_0001>

<llo_original>
// kernel: tpu_custom_call.1
$region0: #{tpu_custom_call.1}
  #allocation0 [shape = 'u32[]', space=smem, size = 0x4, offset = 0x4, fixed_abs, tag = 'smem constant byte address 0x4 - core index']
  #allocation1 [shape = 'u32[72,128]{1,0:T(1,128)}', space=vmem, size = 0x9000, scoped, tag = 'internal scratch']
  #allocation2 [shape = 'bf16[2,8,384]{2,1,0:T(8,128)(2,1)}', space=vmem, size = 0x3000, scoped, tag = 'scratch operand']
  #allocation3 [shape = 'f32[2,8,128]{2,1,0:T(8,128)}', space=vmem, size = 0x2000, scoped, tag = 'scratch operand']
  %s0 = inlined_call_operand.hbm [shape: f32[2,8,16], index: 0, kind: input, shape index: {}]
  %s1 = inlined_call_operand.hbm [shape: bf16[16,384], index: 1, kind: input, shape index: {}]
  %s2 = inlined_call_operand.hbm [shape: f32[1,384], index: 2, kind: input, shape index: {}]
  %s3 = inlined_call_operand.hbm [shape: f32[2,8,16], index: 3, kind: output, shape index: {}]
  %s4 = sld [smem:[#allocation0]]
  $region34: #{tpu_custom_call.1} parent=0
    _
  %s6 = ssub.s32 1, %s4
  %s7 = scalar_select 0, %s6, %s4
  $region1: #{tpu_custom_call.1} parent=0
    #allocation4 [shape = 'u8[8192]{0}', space=vmem, size = 0x2000, scoped, tag = 'input window, operand 0, single buffered']
    #allocation5 [shape = 's32[1]{0}', space=sflag, size = 0x4, scoped, tag = 'scoped memory for tpu_custom_call.1']
    #allocation6 [shape = 's32[1]{0}', space=sflag, size = 0x4, scoped, tag = 'scoped memory for tpu_custom_call.1']
    #allocation7 [shape = 'u8[12288]{0}', space=vmem, size = 0x3000, scoped, tag = 'input window, operand 1, single buffered']
    #allocation8 [shape = 's32[1]{0}', space=sflag, size = 0x4, scoped, tag = 'scoped memory for tpu_custom_call.1']
    #allocation9 [shape = 'u8[1536]{0}', space=vmem, size = 0x800, scoped, tag = 'input window, operand 2, single buffered']
    #allocation10 [shape = 'u8[8192]{0}', space=vmem, size = 0x2000, scoped, tag = 'output window, operand 0, single buffered']
    %8 = vsyncpa [#allocation5], 0
    %9 = vsyncpa [#allocation8], 0
    %10 = vsyncpa [#allocation6], 0
    // Predicated region
    $region2: #{tpu_custom_call.1} parent=1 // pred_check
      _
    $region3: #{tpu_custom_call.1} parent=1 // pred_check_branch
      %12 = sbr.rel (0) target = $region5
    $region4: #{tpu_custom_call.1} parent=1 // pred_region
      %14 = vsyncadd [#allocation5], 0
      %s15 = sshll.u32 %s0, 4
      %s16 = int_to_ptr.hbm [resolvable:$true] %s15
      %s17 = sshll.u32 [#allocation4], 4
      %s18 = int_to_ptr.vmem [resolvable:$true] %s17
      %23 = dma.hbm_to_vmem [thread:$0]  %s16, 256, %s18, [#allocation5], 128, 128, 8
    $region5: #{tpu_custom_call.1} parent=1 // pred_fallthru
      _
    // Predicated region
    $region6: #{tpu_custom_call.1} parent=1 // pred_check
      _
    $region7: #{tpu_custom_call.1} parent=1 // pred_check_branch
      %25 = sbr.rel (0) target = $region9
    $region8: #{tpu_custom_call.1} parent=1 // pred_region
      %27 = vsyncadd [#allocation8], 0
      %s28 = sshll.u32 %s1, 4
      %s29 = int_to_ptr.hbm [resolvable:$true] %s28
      %s30 = sshll.u32 [#allocation7], 4
      %s31 = int_to_ptr.vmem [resolvable:$true] %s30
      %36 = dma.hbm_to_vmem [thread:$0]  %s29, 384, %s31, [#allocation8], 192, 192, 12
    $region9: #{tpu_custom_call.1} parent=1 // pred_fallthru
      _
    // Predicated region
    $region10: #{tpu_custom_call.1} parent=1 // pred_check
      _
    $region11: #{tpu_custom_call.1} parent=1 // pred_check_branch
      %38 = sbr.rel (0) target = $region13
    $region12: #{tpu_custom_call.1} parent=1 // pred_region
      %40 = vsyncadd [#allocation8], 0
      %s42 = sshll.u32 %s2, 4
      %s43 = int_to_ptr.hbm [resolvable:$true] %s42
      %s44 = sshll.u32 [#allocation9], 4
      %s45 = int_to_ptr.vmem [resolvable:$true] %s44
      %47 = dma.hbm_to_vmem [thread:$0]  %s43, 48, %s45, [#allocation8]
    $region13: #{tpu_custom_call.1} parent=1 // pred_fallthru
      _
    // Predicated region
    $region14: #{tpu_custom_call.1} parent=1 // pred_check
      _
    $region15: #{tpu_custom_call.1} parent=1 // pred_check_branch
      %49 = sbr.rel (0) target = $region17
    $region16: #{tpu_custom_call.1} parent=1 // pred_region
      %51 = dma.done [#allocation5], 256
    $region17: #{tpu_custom_call.1} parent=1 // pred_fallthru
      _
    // Predicated region
    $region18: #{tpu_custom_call.1} parent=1 // pred_check
      _
    $region19: #{tpu_custom_call.1} parent=1 // pred_check_branch
      %53 = sbr.rel (0) target = $region21
    $region20: #{tpu_custom_call.1} parent=1 // pred_region
      %55 = dma.done [#allocation8], 384
    $region21: #{tpu_custom_call.1} parent=1 // pred_fallthru
      _
    // Predicated region
    $region22: #{tpu_custom_call.1} parent=1 // pred_check
      _
    $region23: #{tpu_custom_call.1} parent=1 // pred_check_branch
      %57 = sbr.rel (0) target = $region25
    $region24: #{tpu_custom_call.1} parent=1 // pred_region
      %59 = dma.done [#allocation8], 48
    $region25: #{tpu_custom_call.1} parent=1 // pred_fallthru
      _
    %v61 = vld [vmem:[#allocation4] sm:$0xff]
    %v62 = vld [vmem:[#allocation4 + $0x8] sm:$0xff]
    %v63 = vpack.c.bf16 %v62, %v61
    %v64 = vld [vmem:[#allocation7] sm:$0xff]
    %v65 = vld [vmem:[#allocation7 + $0x8] sm:$0xf]
    %v66 = vld [vmem:[#allocation7 + $0xc] sm:$0xff]
    %v67 = vld [vmem:[#allocation7 + $0x14] sm:$0xf]
    %v68 = vld [vmem:[#allocation9] sm:$0x7]
    %v70 = vperm.slane %v68, 0
    %v71 = vperm.slane %v68, 1
    %v72 = vperm.slane %v68, 2
    %v80 = vunpack.c.l.b16 %v64
    %v81 = vunpack.c.h.b16 %v64
    %v82 = vunpack.c.l.b16 %v65
    %v83 = vunpack.c.l.b16 %v66
    %v84 = vunpack.c.h.b16 %v66
    %v85 = vunpack.c.l.b16 %v67
    %v86 = vpack.c.b16 %v83, %v80
    %v87 = vpack.c.b16 %v84, %v81
    %v88 = vpack.c.b16 %v85, %v82
    %vm92 = vcmask 130048
    %v94 = vsel %vm92, %v63, 0
    %96 = vmatpush.bf16.msra.mxu0 0
    %97 = vmatpush.bf16.msra.mxu0 0
    %98 = vmatpush.bf16.msra.mxu0 0
    %99 = vmatpush.bf16.msra.mxu0 0
    %100 = vmatpush.bf16.msra.mxu0 0
    %101 = vmatpush.bf16.msra.mxu0 0
    %102 = vmatpush.bf16.msra.mxu0 0
    %103 = vmatpush.bf16.msra.mxu0 %v86
    %104 = vmatmul.bf16.gmra.mxu0 %v94
    %v105 = vpop.f32.mrf.mxu0
    %v106 = vadd.f32 %v70, %v105
    %v107 = vpop.f32.mrf.mxu0
    %v108 = vadd.f32 %v70, %v107
    %109 = vdwg.mxu0
    %110 = vmatpush.bf16.msra.mxu0 0
    %111 = vmatpush.bf16.msra.mxu0 0
    %112 = vmatpush.bf16.msra.mxu0 0
    %113 = vmatpush.bf16.msra.mxu0 0
    %114 = vmatpush.bf16.msra.mxu0 0
    %115 = vmatpush.bf16.msra.mxu0 0
    %116 = vmatpush.bf16.msra.mxu0 0
    %117 = vmatpush.bf16.msra.mxu0 %v87
    %118 = vmatmul.bf16.gmra.mxu0 %v94
    %v119 = vpop.f32.mrf.mxu0
    %v120 = vadd.f32 %v71, %v119
    %v121 = vpop.f32.mrf.mxu0
    %v122 = vadd.f32 %v71, %v121
    %123 = vdwg.mxu0
    %124 = vmatpush.bf16.msra.mxu0 0
    %125 = vmatpush.bf16.msra.mxu0 0
    %126 = vmatpush.bf16.msra.mxu0 0
    %127 = vmatpush.bf16.msra.mxu0 0
    %128 = vmatpush.bf16.msra.mxu0 0
    %129 = vmatpush.bf16.msra.mxu0 0
    %130 = vmatpush.bf16.msra.mxu0 0
    %131 = vmatpush.bf16.msra.mxu0 %v88
    %132 = vmatmul.bf16.gmra.mxu0 %v94
    %v133 = vpop.f32.mrf.mxu0
    %v134 = vadd.f32 %v72, %v133
    %v135 = vpop.f32.mrf.mxu0
    %v136 = vadd.f32 %v72, %v135
    %137 = vdwg.mxu0
    %v138 = vpack.c.bf16 %v120, %v106
    %v139 = vpack.c.bf16 %v134, %v134
    %v140 = vpack.c.bf16 %v122, %v108
    %v141 = vpack.c.bf16 %v136, %v136
    %142 = vst [vmem:[#allocation2] sm:$0xff] %v138
    %143 = vst [vmem:[#allocation2 + $0x8] sm:$0xf] %v139
    %144 = vst [vmem:[#allocation2 + $0xc] sm:$0xff] %v140
    %145 = vst [vmem:[#allocation2 + $0x14] sm:$0xf] %v141
    %146 = vst [vmem:[#allocation3] sm:$0xff] 0.0
    %147 = vst [vmem:[#allocation3 + $0x8] sm:$0xff] 0.0
    %v148 = vlaneseq
    %v149 = vshrl.u32 %v148, 7
    %v150 = vlaneseq
    %v151 = vand.u32 %v150, 127
    %v152 = vld [vmem:[#allocation2 + $0x4] sm:$0xf]
    %v153 = vld [vmem:[#allocation2 + $0x10] sm:$0xf]
    %s154 = smul.u32 0, 3
    %s155 = smul.addr %s154, 4
    %s156 = scalar_lea.vmem [#allocation2], %s155
    %v157 = vld [vmem:[%s156] sm:$0xf]
    %v158 = vld [vmem:[%s156 + $0xc] sm:$0xf]
    %v159 = vld [vmem:[%s156 + $0x8] sm:$0xf]
    %v160 = vld [vmem:[%s156 + $0x14] sm:$0xf]
    %v161 = vstv 0
    %v162 = vadd.s32 %v151, %v161
    %vm163 = vcmp.gt.s32.totalorder %v162, %v149
    %v164 = vsel %vm163, -inf, 0.0
    %165 = vmatpush.bf16.xpose.msra.mxu0 0
    %166 = vmatpush.bf16.xpose.msra.mxu0 0
    %167 = vmatpush.bf16.xpose.msra.mxu0 0
    %168 = vmatpush.bf16.xpose.msra.mxu0 0
    %169 = vmatpush.bf16.xpose.msra.mxu0 0
    %170 = vmatpush.bf16.xpose.msra.mxu0 0
    %171 = vmatpush.bf16.xpose.msra.mxu0 0
    %172 = vmatpush.bf16.xpose.msra.mxu0 %v157
    %173 = vmatmul.bf16.gmra.mxu0 %v152
    %v174 = vpop.f32.mrf.mxu0
    %v175 = vadd.f32 %v164, %v174
    %v176 = vpop.f32.mrf.mxu0
    %177 = vdwg.mxu0
    %178 = vmatpush.bf16.xpose.msra.mxu0 0
    %179 = vmatpush.bf16.xpose.msra.mxu0 0
    %180 = vmatpush.bf16.xpose.msra.mxu0 0
    %181 = vmatpush.bf16.xpose.msra.mxu0 0
    %182 = vmatpush.bf16.xpose.msra.mxu0 0
    %183 = vmatpush.bf16.xpose.msra.mxu0 0
    %184 = vmatpush.bf16.xpose.msra.mxu0 0
    %185 = vmatpush.bf16.xpose.msra.mxu0 %v158
    %186 = vmatmul.bf16.gmra.mxu0 %v153
    %v187 = vpop.f32.mrf.mxu0
    %v188 = vadd.f32 %v164, %v187
    %v189 = vpop.f32.mrf.mxu0
    %190 = vdwg.mxu0
    %vm191 = vcmask 64512
    %v192 = vsel %vm191, %v175, -inf
    %v193 = vrot.slane %v192, 4
    %v194 = vmax.f32 %v192, %v193
    %v195 = vrot.slane %v194, 2
    %v196 = vmax.f32 %v194, %v195
    %v197 = vrot.slane %v196, 1
    %v198 = vmax.f32 %v196, %v197
    %v199 = vsel %vm191, %v188, -inf
    %v200 = vrot.slane %v199, 4
    %v201 = vmax.f32 %v199, %v200
    %v202 = vrot.slane %v201, 2
    %v203 = vmax.f32 %v201, %v202
    %v204 = vrot.slane %v203, 1
    %v205 = vmax.f32 %v203, %v204
    %v206 = vsub.f32 %v175, %v198
    %v207 = vsub.f32 %v188, %v205
    %v208 = vpack.c.bf16 %v206, %v206
    %v209 = vpack.c.bf16 %v207, %v207
    %v210 = vunpack.c.l.bf16 %v208
    %v211 = vunpack.c.l.bf16 %v209
    %v212 = vmul.f32 %v210, 1.442695
    %v213 = vpow.pop %v212
    %v214 = vmul.f32 %v211, 1.442695
    %v215 = vpow.pop %v214
    %v216 = vpack.c.bf16 %v213, %v213
    %v217 = vpack.c.bf16 %v215, %v215
    %v218 = vunpack.c.l.bf16 %v216
    %v219 = vunpack.c.l.bf16 %v217
    %v220 = vsel %vm191, %v218, 0.0
    %v221 = vrot.slane %v220, 4
    %v222 = vadd.f32 %v220, %v221
    %v223 = vrot.slane %v222, 2
    %v224 = vadd.f32 %v222, %v223
    %v225 = vrot.slane %v224, 1
    %v226 = vadd.f32 %v224, %v225
    %v227 = vsel %vm191, %v219, 0.0
    %v228 = vrot.slane %v227, 4
    %v229 = vadd.f32 %v227, %v228
    %v230 = vrot.slane %v229, 2
    %v231 = vadd.f32 %v229, %v230
    %v232 = vrot.slane %v231, 1
    %v233 = vadd.f32 %v231, %v232
    %v234 = vmul.f32 %v226, 2.828427
    %v235 = vmul.f32 %v233, 2.828427
    %v236 = vrcp.pop %v234
    %v237 = vrcp.pop %v235
    %v238 = vpack.c.bf16 %v236, %v236
    %v239 = vpack.c.bf16 %v237, %v237
    %v240 = vunpack.c.l.bf16 %v238
    %v241 = vunpack.c.l.bf16 %v239
    %v242 = vmul.f32 %v218, %v240
    %v243 = vmul.f32 %v219, %v241
    %v244 = vpack.c.bf16 %v242, %v242
    %v245 = vpack.c.bf16 %v243, %v243
    %v246 = vld [vmem:[#allocation3] sm:$0xff]
    %v247 = vld [vmem:[#allocation3 + $0x8] sm:$0xff]
    %v249 = vsel %vm191, %v244, 0
    %vm251 = vcmask 1043456
    %v253 = vsel %vm251, %v159, 0
    %255 = vmatpush.bf16.msra.mxu0 0
    %256 = vmatpush.bf16.msra.mxu0 0
    %257 = vmatpush.bf16.msra.mxu0 0
    %258 = vmatpush.bf16.msra.mxu0 0
    %259 = vmatpush.bf16.msra.mxu0 0
    %260 = vmatpush.bf16.msra.mxu0 0
    %261 = vmatpush.bf16.msra.mxu0 0
    %262 = vmatpush.bf16.msra.mxu0 %v253
    %263 = vmatmul.bf16.gmra.mxu0 %v249
    %v264 = vpop.f32.mrf.mxu0
    %v265 = vadd.f32 0.0, %v264
    %v266 = vpop.f32.mrf.mxu0
    %267 = vdwg.mxu0
    %v269 = vsel %vm191, %v245, 0
    %v272 = vsel %vm251, %v160, 0
    %274 = vmatpush.bf16.msra.mxu0 0
    %275 = vmatpush.bf16.msra.mxu0 0
    %276 = vmatpush.bf16.msra.mxu0 0
    %277 = vmatpush.bf16.msra.mxu0 0
    %278 = vmatpush.bf16.msra.mxu0 0
    %279 = vmatpush.bf16.msra.mxu0 0
    %280 = vmatpush.bf16.msra.mxu0 0
    %281 = vmatpush.bf16.msra.mxu0 %v272
    %282 = vmatmul.bf16.gmra.mxu0 %v269
    %v283 = vpop.f32.mrf.mxu0
    %v284 = vadd.f32 0.0, %v283
    %v285 = vpop.f32.mrf.mxu0
    %286 = vdwg.mxu0
    %v287 = vadd.f32 %v246, %v265
    %v288 = vadd.f32 %v247, %v284
    %289 = vst [vmem:[#allocation3] sm:$0xff] %v287
    %290 = vst [vmem:[#allocation3 + $0x8] sm:$0xff] %v288
    %v291 = vld [vmem:[#allocation4] sm:$0xff]
    %v292 = vld [vmem:[#allocation4 + $0x8] sm:$0xff]
    %v293 = vld [vmem:[#allocation3] sm:$0xff]
    %v294 = vld [vmem:[#allocation3 + $0x8] sm:$0xff]
    %v295 = vadd.f32 %v291, %v293
    %v296 = vadd.f32 %v292, %v294
    %297 = vst.msk [vmem:[#allocation10] sm:$0xff] %vm92, %v295
    %298 = vst.msk [vmem:[#allocation10 + $0x8] sm:$0xff] %vm92, %v296
    // Predicated region
    $region26: #{tpu_custom_call.1} parent=1 // pred_check
      _
    $region27: #{tpu_custom_call.1} parent=1 // pred_check_branch
      %300 = sbr.rel (0) target = $region29
    $region28: #{tpu_custom_call.1} parent=1 // pred_region
      %302 = vsyncadd [#allocation6], 0
      %s303 = sshll.u32 [#allocation10], 4
      %s304 = int_to_ptr.vmem [resolvable:$true] %s303
      %s305 = sshll.u32 %s3, 4
      %s306 = int_to_ptr.hbm [resolvable:$true] %s305
      %311 = dma.vmem_to_hbm [thread:$0]  %s304, 256, %s306, [#allocation6], 128, 128, 8
    $region29: #{tpu_custom_call.1} parent=1 // pred_fallthru
      _
    // Predicated region
    $region30: #{tpu_custom_call.1} parent=1 // pred_check
      _
    $region31: #{tpu_custom_call.1} parent=1 // pred_check_branch
      %313 = sbr.rel (0) target = $region33
    $region32: #{tpu_custom_call.1} parent=1 // pred_region
      %315 = dma.done [#allocation6], 256
    $region33: #{tpu_custom_call.1} parent=1 // pred_fallthru
      _
    %316 = vsyncpa [#allocation5], 1
    %317 = vsyncpa [#allocation8], 1
    %318 = vsyncpa [#allocation6], 1

// kernel: tpu_custom_call.1
$region0: #{tpu_custom_call.1}
  #allocation0 [shape = 'u32[]', space=smem, size = 0x4, offset = 0x4, fixed_abs, tag = 'smem constant byte address 0x4 - core index']
  #allocation1 [shape = 'u32[72,128]{1,0:T(1,128)}', space=vmem, size = 0x9000, scoped, tag = 'internal scratch']
  #allocation2 [shape = 'bf16[2,8,384]{2,1,0:T(8,128)(2,1)}', space=vmem, size = 0x3000, scoped, tag = 'scratch operand']
  #allocation3 [shape = 'f32[2,8,128]{2,1,0:T(8,128)}', space=vmem, size = 0x2000, scoped, tag = 'scratch operand']
  %s0 = inlined_call_operand.hbm [shape: f32[2,8,16], index: 0, kind: input, shape index: {}]
  %s1 = inlined_call_operand.hbm [shape: bf16[16,384], index: 1, kind: input, shape index: {}]
  %s2 = inlined_call_operand.hbm [shape: f32[1,384], index: 2, kind: input, shape index: {}]
  %s3 = inlined_call_operand.hbm [shape: f32[2,8,16], index: 3, kind: output, shape index: {}]
  %s4 = sld [smem:[#allocation0]]
  $region34: #{tpu_custom_call.1} parent=0
    _
  %s6 = ssub.s32 1, %s4
  %s7 = scalar_select 0, %s6, %s4
  $region1: #{tpu_custom_call.1} parent=0
    #allocation4 [shape = 'u8[8192]{0}', space=vmem, size = 0x2000, scoped, tag = 'input window, operand 0, single buffered']
    #allocation5 [shape = 's32[1]{0}', space=sflag, size = 0x4, scoped, tag = 'scoped memory for tpu_custom_call.1']
    #allocation6 [shape = 's32[1]{0}', space=sflag, size = 0x4, scoped, tag = 'scoped memory for tpu_custom_call.1']
    #allocation7 [shape = 'u8[12288]{0}', space=vmem, size = 0x3000, scoped, tag = 'input window, operand 1, single buffered']
    #allocation8 [shape = 's32[1]{0}', space=sflag, size = 0x4, scoped, tag = 'scoped memory for tpu_custom_call.1']
    #allocation9 [shape = 'u8[1536]{0}', space=vmem, size = 0x800, scoped, tag = 'input window, operand 2, single buffered']
    #allocation10 [shape = 'u8[8192]{0}', space=vmem, size = 0x2000, scoped, tag = 'output window, operand 0, single buffered']
    %8 = vsyncpa [#allocation5], 0
    %9 = vsyncpa [#allocation8], 0
    %10 = vsyncpa [#allocation6], 0
    // Predicated region
    $region2: #{tpu_custom_call.1} parent=1 // pred_check
      _
    $region3: #{tpu_custom_call.1} parent=1 // pred_check_branch
      %12 = sbr.rel (0) target = $region5
    $region4: #{tpu_custom_call.1} parent=1 // pred_region
      %14 = vsyncadd [#allocation5], 0
      %s15 = sshll.u32 %s0, 4
      %s16 = int_to_ptr.hbm [resolvable:$true] %s15
      %s17 = sshll.u32 [#allocation4], 4
      %s18 = int_to_ptr.vmem [resolvable:$true] %s17
      %23 = dma.hbm_to_vmem [thread:$0]  %s16, 256, %s18, [#allocation5], 128, 128, 8
    $region5: #{tpu_custom_call.1} parent=1 // pred_fallthru
      _
    // Predicated region
    $region6: #{tpu_custom_call.1} parent=1 // pred_check
      _
    $region7: #{tpu_custom_call.1} parent=1 // pred_check_branch
      %25 = sbr.rel (0) target = $region9
    $region8: #{tpu_custom_call.1} parent=1 // pred_region
      %27 = vsyncadd [#allocation8], 0
      %s28 = sshll.u32 %s1, 4
      %s29 = int_to_ptr.hbm [resolvable:$true] %s28
      %s30 = sshll.u32 [#allocation7], 4
      %s31 = int_to_ptr.vmem [resolvable:$true] %s30
      %36 = dma.hbm_to_vmem [thread:$0]  %s29, 384, %s31, [#allocation8], 192, 192, 12
    $region9: #{tpu_custom_call.1} parent=1 // pred_fallthru
      _
    // Predicated region
    $region10: #{tpu_custom_call.1} parent=1 // pred_check
      _
    $region11: #{tpu_custom_call.1} parent=1 // pred_check_branch
      %38 = sbr.rel (0) target = $region13
    $region12: #{tpu_custom_call.1} parent=1 // pred_region
      %40 = vsyncadd [#allocation8], 0
      %s42 = sshll.u32 %s2, 4
      %s43 = int_to_ptr.hbm [resolvable:$true] %s42
      %s44 = sshll.u32 [#allocation9], 4
      %s45 = int_to_ptr.vmem [resolvable:$true] %s44
      %47 = dma.hbm_to_vmem [thread:$0]  %s43, 48, %s45, [#allocation8]
    $region13: #{tpu_custom_call.1} parent=1 // pred_fallthru
      _
    // Predicated region
    $region14: #{tpu_custom_call.1} parent=1 // pred_check
      _
    $region15: #{tpu_custom_call.1} parent=1 // pred_check_branch
      %49 = sbr.rel (0) target = $region17
    $region16: #{tpu_custom_call.1} parent=1 // pred_region
      %51 = dma.done [#allocation5], 256
    $region17: #{tpu_custom_call.1} parent=1 // pred_fallthru
      _
    // Predicated region
    $region18: #{tpu_custom_call.1} parent=1 // pred_check
      _
    $region19: #{tpu_custom_call.1} parent=1 // pred_check_branch
      %53 = sbr.rel (0) target = $region21
    $region20: #{tpu_custom_call.1} parent=1 // pred_region
      %55 = dma.done [#allocation8], 384
    $region21: #{tpu_custom_call.1} parent=1 // pred_fallthru
      _
    // Predicated region
    $region22: #{tpu_custom_call.1} parent=1 // pred_check
      _
    $region23: #{tpu_custom_call.1} parent=1 // pred_check_branch
      %57 = sbr.rel (0) target = $region25
    $region24: #{tpu_custom_call.1} parent=1 // pred_region
      %59 = dma.done [#allocation8], 48
    $region25: #{tpu_custom_call.1} parent=1 // pred_fallthru
      _
    %v61 = vld [vmem:[#allocation4] sm:$0xff]
    %v62 = vld [vmem:[#allocation4 + $0x8] sm:$0xff]
    %v63 = vpack.c.bf16 %v62, %v61
    %v64 = vld [vmem:[#allocation7] sm:$0xff]
    %v65 = vld [vmem:[#allocation7 + $0x8] sm:$0xf]
    %v66 = vld [vmem:[#allocation7 + $0xc] sm:$0xff]
    %v67 = vld [vmem:[#allocation7 + $0x14] sm:$0xf]
    %v68 = vld [vmem:[#allocation9] sm:$0x7]
    %v70 = vperm.slane %v68, 0
    %v71 = vperm.slane %v68, 1
    %v72 = vperm.slane %v68, 2
    %v80 = vunpack.c.l.b16 %v64
    %v81 = vunpack.c.h.b16 %v64
    %v82 = vunpack.c.l.b16 %v65
    %v83 = vunpack.c.l.b16 %v66
    %v84 = vunpack.c.h.b16 %v66
    %v85 = vunpack.c.l.b16 %v67
    %v86 = vpack.c.b16 %v83, %v80
    %v87 = vpack.c.b16 %v84, %v81
    %v88 = vpack.c.b16 %v85, %v82
    %vm92 = vcmask 130048
    %v94 = vsel %vm92, %v63, 0
    %96 = vmatpush.bf16.msra.mxu0 0
    %97 = vmatpush.bf16.msra.mxu0 0
    %98 = vmatpush.bf16.msra.mxu0 0
    %99 = vmatpush.bf16.msra.mxu0 0
    %100 = vmatpush.bf16.msra.mxu0 0
    %101 = vmatpush.bf16.msra.mxu0 0
    %102 = vmatpush.bf16.msra.mxu0 0
    %103 = vmatpush.bf16.msra.mxu0 %v86
    %104 = vmatmul.bf16.gmra.mxu0 %v94
    %v105 = vpop.f32.mrf.mxu0
    %v106 = vadd.f32 %v70, %v105
    %v107 = vpop.f32.mrf.mxu0
    %v108 = vadd.f32 %v70, %v107
    %109 = vdwg.mxu0
    %110 = vmatpush.bf16.msra.mxu0 0
    %111 = vmatpush.bf16.msra.mxu0 0
    %112 = vmatpush.bf16.msra.mxu0 0
    %113 = vmatpush.bf16.msra.mxu0 0
    %114 = vmatpush.bf16.msra.mxu0 0
    %115 = vmatpush.bf16.msra.mxu0 0
    %116 = vmatpush.bf16.msra.mxu0 0
    %117 = vmatpush.bf16.msra.mxu0 %v87
    %118 = vmatmul.bf16.gmra.mxu0 %v94
    %v119 = vpop.f32.mrf.mxu0
    %v120 = vadd.f32 %v71, %v119
    %v121 = vpop.f32.mrf.mxu0
    %v122 = vadd.f32 %v71, %v121
    %123 = vdwg.mxu0
    %124 = vmatpush.bf16.msra.mxu0 0
    %125 = vmatpush.bf16.msra.mxu0 0
    %126 = vmatpush.bf16.msra.mxu0 0
    %127 = vmatpush.bf16.msra.mxu0 0
    %128 = vmatpush.bf16.msra.mxu0 0
    %129 = vmatpush.bf16.msra.mxu0 0
    %130 = vmatpush.bf16.msra.mxu0 0
    %131 = vmatpush.bf16.msra.mxu0 %v88
    %132 = vmatmul.bf16.gmra.mxu0 %v94
    %v133 = vpop.f32.mrf.mxu0
    %v134 = vadd.f32 %v72, %v133
    %v135 = vpop.f32.mrf.mxu0
    %v136 = vadd.f32 %v72, %v135
    %137 = vdwg.mxu0
    %v138 = vpack.c.bf16 %v120, %v106
    %v139 = vpack.c.bf16 %v134, %v134
    %v140 = vpack.c.bf16 %v122, %v108
    %v141 = vpack.c.bf16 %v136, %v136
    %142 = vst [vmem:[#allocation2] sm:$0xff] %v138
    %143 = vst [vmem:[#allocation2 + $0x8] sm:$0xf] %v139
    %144 = vst [vmem:[#allocation2 + $0xc] sm:$0xff] %v140
    %145 = vst [vmem:[#allocation2 + $0x14] sm:$0xf] %v141
    %146 = vst [vmem:[#allocation3] sm:$0xff] 0.0
    %147 = vst [vmem:[#allocation3 + $0x8] sm:$0xff] 0.0
    %v148 = vlaneseq
    %v149 = vshrl.u32 %v148, 7
    %v150 = vlaneseq
    %v151 = vand.u32 %v150, 127
    %v152 = vld [vmem:[#allocation2 + $0x4] sm:$0xf]
    %v153 = vld [vmem:[#allocation2 + $0x10] sm:$0xf]
    %s154 = smul.u32 0, 3
    %s155 = smul.addr %s154, 4
    %s156 = scalar_lea.vmem [#allocation2], %s155
    %v157 = vld [vmem:[%s156] sm:$0xf]
    %v158 = vld [vmem:[%s156 + $0xc] sm:$0xf]
    %v159 = vld [vmem:[%s156 + $0x8] sm:$0xf]
    %v160 = vld [vmem:[%s156 + $0x14] sm:$0xf]
    %v161 = vstv 0
    %v162 = vadd.s32 %v151, %v161
    %vm163 = vcmp.gt.s32.totalorder %v162, %v149
    %v164 = vsel %vm163, -inf, 0.0
    %165 = vmatpush.bf16.xpose.msra.mxu0 0
    %166 = vmatpush.bf16.xpose.msra.mxu0 0
    %167 = vmatpush.bf16.xpose.msra.mxu0 0
    %168 = vmatpush.bf16.xpose.msra.mxu0 0
    %169 = vmatpush.bf16.xpose.msra.mxu0 0
    %170 = vmatpush.bf16.xpose.msra.mxu0 0
    %171 = vmatpush.bf16.xpose.msra.mxu0 0
    %172 = vmatpush.bf16.xpose.msra.mxu0 %v157
    %173 = vmatmul.bf16.gmra.mxu0 %v152
    %v174 = vpop.f32.mrf.mxu0
    %v175 = vadd.f32 %v164, %v174
    %v176 = vpop.f32.mrf.mxu0
    %177 = vdwg.mxu0
    %178 = vmatpush.bf16.xpose.msra.mxu0 0
    %179 = vmatpush.bf16.xpose.msra.mxu0 0
    %180 = vmatpush.bf16.xpose.msra.mxu0 0
    %181 = vmatpush.bf16.xpose.msra.mxu0 0
    %182 = vmatpush.bf16.xpose.msra.mxu0 0
    %183 = vmatpush.bf16.xpose.msra.mxu0 0
    %184 = vmatpush.bf16.xpose.msra.mxu0 0
    %185 = vmatpush.bf16.xpose.msra.mxu0 %v158
    %186 = vmatmul.bf16.gmra.mxu0 %v153
    %v187 = vpop.f32.mrf.mxu0
    %v188 = vadd.f32 %v164, %v187
    %v189 = vpop.f32.mrf.mxu0
    %190 = vdwg.mxu0
    %vm191 = vcmask 64512
    %v192 = vsel %vm191, %v175, -inf
    %v193 = vrot.slane %v192, 4
    %v194 = vmax.f32 %v192, %v193
    %v195 = vrot.slane %v194, 2
    %v196 = vmax.f32 %v194, %v195
    %v197 = vrot.slane %v196, 1
    %v198 = vmax.f32 %v196, %v197
    %v199 = vsel %vm191, %v188, -inf
    %v200 = vrot.slane %v199, 4
    %v201 = vmax.f32 %v199, %v200
    %v202 = vrot.slane %v201, 2
    %v203 = vmax.f32 %v201, %v202
    %v204 = vrot.slane %v203, 1
    %v205 = vmax.f32 %v203, %v204
    %v206 = vsub.f32 %v175, %v198
    %v207 = vsub.f32 %v188, %v205
    %v208 = vpack.c.bf16 %v206, %v206
    %v209 = vpack.c.bf16 %v207, %v207
    %v210 = vunpack.c.l.bf16 %v208
    %v211 = vunpack.c.l.bf16 %v209
    %v212 = vmul.f32 %v210, 1.442695
    %v213 = vpow.pop %v212
    %v214 = vmul.f32 %v211, 1.442695
    %v215 = vpow.pop %v214
    %v216 = vpack.c.bf16 %v213, %v213
    %v217 = vpack.c.bf16 %v215, %v215
    %v218 = vunpack.c.l.bf16 %v216
    %v219 = vunpack.c.l.bf16 %v217
    %v220 = vsel %vm191, %v218, 0.0
    %v221 = vrot.slane %v220, 4
    %v222 = vadd.f32 %v220, %v221
    %v223 = vrot.slane %v222, 2
    %v224 = vadd.f32 %v222, %v223
    %v225 = vrot.slane %v224, 1
    %v226 = vadd.f32 %v224, %v225
    %v227 = vsel %vm191, %v219, 0.0
    %v228 = vrot.slane %v227, 4
    %v229 = vadd.f32 %v227, %v228
    %v230 = vrot.slane %v229, 2
    %v231 = vadd.f32 %v229, %v230
    %v232 = vrot.slane %v231, 1
    %v233 = vadd.f32 %v231, %v232
    %v234 = vmul.f32 %v226, 2.828427
    %v235 = vmul.f32 %v233, 2.828427
    %v236 = vrcp.pop %v234
    %v237 = vrcp.pop %v235
    %v238 = vpack.c.bf16 %v236, %v236
    %v239 = vpack.c.bf16 %v237, %v237
    %v240 = vunpack.c.l.bf16 %v238
    %v241 = vunpack.c.l.bf16 %v239
    %v242 = vmul.f32 %v218, %v240
    %v243 = vmul.f32 %v219, %v241
    %v244 = vpack.c.bf16 %v242, %v242
    %v245 = vpack.c.bf16 %v243, %v243
    %v246 = vld [vmem:[#allocation3] sm:$0xff]
    %v247 = vld [vmem:[#allocation3 + $0x8] sm:$0xff]
    %v249 = vsel %vm191, %v244, 0
    %vm251 = vcmask 1043456
    %v253 = vsel %vm251, %v159, 0
    %255 = vmatpush.bf16.msra.mxu0 0
    %256 = vmatpush.bf16.msra.mxu0 0
    %257 = vmatpush.bf16.msra.mxu0 0
    %258 = vmatpush.bf16.msra.mxu0 0
    %259 = vmatpush.bf16.msra.mxu0 0
    %260 = vmatpush.bf16.msra.mxu0 0
    %261 = vmatpush.bf16.msra.mxu0 0
    %262 = vmatpush.bf16.msra.mxu0 %v253
    %263 = vmatmul.bf16.gmra.mxu0 %v249
    %v264 = vpop.f32.mrf.mxu0
    %v265 = vadd.f32 0.0, %v264
    %v266 = vpop.f32.mrf.mxu0
    %267 = vdwg.mxu0
    %v269 = vsel %vm191, %v245, 0
    %v272 = vsel %vm251, %v160, 0
    %274 = vmatpush.bf16.msra.mxu0 0
    %275 = vmatpush.bf16.msra.mxu0 0
    %276 = vmatpush.bf16.msra.mxu0 0
    %277 = vmatpush.bf16.msra.mxu0 0
    %278 = vmatpush.bf16.msra.mxu0 0
    %279 = vmatpush.bf16.msra.mxu0 0
    %280 = vmatpush.bf16.msra.mxu0 0
    %281 = vmatpush.bf16.msra.mxu0 %v272
    %282 = vmatmul.bf16.gmra.mxu0 %v269
    %v283 = vpop.f32.mrf.mxu0
    %v284 = vadd.f32 0.0, %v283
    %v285 = vpop.f32.mrf.mxu0
    %286 = vdwg.mxu0
    %v287 = vadd.f32 %v246, %v265
    %v288 = vadd.f32 %v247, %v284
    %289 = vst [vmem:[#allocation3] sm:$0xff] %v287
    %290 = vst [vmem:[#allocation3 + $0x8] sm:$0xff] %v288
    %v291 = vld [vmem:[#allocation4] sm:$0xff]
    %v292 = vld [vmem:[#allocation4 + $0x8] sm:$0xff]
    %v293 = vld [vmem:[#allocation3] sm:$0xff]
    %v294 = vld [vmem:[#allocation3 + $0x8] sm:$0xff]
    %v295 = vadd.f32 %v291, %v293
    %v296 = vadd.f32 %v292, %v294
    %297 = vst.msk [vmem:[#allocation10] sm:$0xff] %vm92, %v295
    %298 = vst.msk [vmem:[#allocation10 + $0x8] sm:$0xff] %vm92, %v296
    // Predicated region
    $region26: #{tpu_custom_call.1} parent=1 // pred_check
      _
    $region27: #{tpu_custom_call.1} parent=1 // pred_check_branch
      %300 = sbr.rel (0) target = $region29
    $region28: #{tpu_custom_call.1} parent=1 // pred_region
      %302 = vsyncadd [#allocation6], 0
      %s303 = sshll.u32 [#allocation10], 4
      %s304 = int_to_ptr.vmem [resolvable:$true] %s303
      %s305 = sshll.u32 %s3, 4
      %s306 = int_to_ptr.hbm [resolvable:$true] %s305
      %311 = dma.vmem_to_hbm [thread:$0]  %s304, 256, %s306, [#allocation6], 128, 128, 8
    $region29: #{tpu_custom_call.1} parent=1 // pred_fallthru
      _
    // Predicated region
    $region30: #{tpu_custom_call.1} parent=1 // pred_check
      _
    $region31: #{tpu_custom_call.1} parent=1 // pred_check_branch
      %313 = sbr.rel (0) target = $region33
    $region32: #{tpu_custom_call.1} parent=1 // pred_region
      %315 = dma.done [#allocation6], 256
    $region33: #{tpu_custom_call.1} parent=1 // pred_fallthru
      _
    %316 = vsyncpa [#allocation5], 1
    %317 = vsyncpa [#allocation8], 1
    %318 = vsyncpa [#allocation6], 1

</llo_original>
